<compile_context>
chip_gen: v7x
topology: tpu7x:2x2x1
jax: 0.10.0
libtpu: 0.0.40
codegen_flags: <defaults>
</compile_context>

<pallas_src>
import jax
import jax.numpy as jnp
import numpy as np
from jax.experimental import pallas as pl
from jax.experimental.pallas import tpu as pltpu


# ---------------------------------------------------------------------------
# Fused kernel: per row n (a flattened (batch, sentence) pair)
#   count[k, l] = sum_t (pred[k, t] == sent[l]) & (pred[k, t] != 1)   (k in 3P rows)
#   w[0]        = attention_mask                 -> masked-mean numerator/denominator
#   w[1..3P]    = count * attention_mask
#   w[3P+1..R)  = 0                              (pad rows -> 8-sublane aligned)
#   wv          = w @ onehot(sent)               (R, V)   MXU, exact small ints
#   weighted    = wv @ table                     (R, D)   MXU  ( == w @ table[sent] )
#   out[r]      = weighted[r] / max(sum_l w[r, l], 1)     (0 if no match)
# ---------------------------------------------------------------------------
def srl_fused_kernel(pred_ref, sent_row_ref, sent_col_ref, mask_ref, table_ref,
                     out_ref, w_ref):
    pred = pred_ref[...]           # (nb, K, T) int32, K = 3*P
    sent_row = sent_row_ref[...]   # (nb, 1, L) int32   (lane layout, for matching)
    sent_col = sent_col_ref[...]   # (nb, L, 1) int32   (sublane layout, for one-hot)
    mask = mask_ref[...]           # (nb, 1, L) float32
    table = table_ref[...]         # (V, D) bf16/f32 vocab embedding table (VMEM-resident)

    nb, kk, t_len = pred.shape
    l_len = sent_row.shape[-1]
    v_size, d = table.shape

    # Token-match counts for predicate/arg0/arg1 jointly, multiplicity-weighted
    # (same semantics as torch .nonzero() in the reference module).
    count = jnp.zeros((nb, kk, l_len), jnp.float32)
    for t in range(t_len):                       # T is small & static -> unrolled
        p_t = pred[:, :, t:t + 1]                # (nb, K, 1)
        hit = (p_t == sent_row) & (p_t != 1)     # (nb, K, L) lane+sublane broadcast
        count = count + hit.astype(jnp.float32)

    # Weight matrix built in a pre-shaped scratch (no concatenate relayout).
    # Row 0 = attention mask (its matmul row is the masked-mean numerator and
    # its row-total is the token count); rows 1..3P = match counts; rest = 0.
    w_ref[...] = jnp.zeros_like(w_ref)           # also zeroes the pad rows
    w_ref[:, 0:1, :] = mask
    w_ref[:, 1:1 + kk, :] = count * mask
    w = w_ref[...]                               # (nb, R, L) f32

    # Fused embedding gather:   w @ table[sent]  ==  (w @ onehot(sent)) @ table
    # Counts / occupancies are small integers (<= T * token multiplicity <= 256
    # here), so the bf16 casts below are exact; accumulation is f32 on the MXU.
    vocab_iota = jax.lax.broadcasted_iota(jnp.int32, (1, 1, v_size), 2)
    onehot = (sent_col == vocab_iota).astype(jnp.float32).astype(table.dtype)  # (nb, L, V)
    wv = jnp.einsum("nrl,nlv->nrv", w.astype(table.dtype), onehot,
                    preferred_element_type=jnp.float32)                        # (nb, R, V)
    table_b = jnp.broadcast_to(table, (nb, v_size, d))
    weighted = jnp.einsum("nrv,nvd->nrd", wv.astype(table.dtype), table_b,
                          preferred_element_type=jnp.float32)                  # (nb, R, D)

    total = jnp.sum(w, axis=-1, keepdims=True)                                 # (nb, R, 1)
    inv = pl.reciprocal(jnp.maximum(total, 1.0), approx=False)                 # exact 1/x
    out_ref[...] = jnp.where(total > 0.0, weighted * inv, 0.0)


def _pick_row_block(n, l_len, d, kk, t_len, v_size, r_rows, target_bytes=4 << 20):
    """VMEM-budgeted rows-per-grid-step, keeping >= ~8 grid steps for megacore."""
    per_row = (
        2 * 4 * (kk * t_len + 3 * l_len)     # id/mask input blocks (x2 pipeline buffers)
        + 2 * 4 * r_rows * d                 # merged output block (x2 buffers)
        + 4 * r_rows * l_len                 # w scratch
        + 4 * kk * l_len                     # count temporary
        + 2 * l_len * v_size                 # one-hot temporary (bf16)
        + 6 * r_rows * v_size                # wv (f32 + bf16 copy)
        + 2 * v_size * d                     # broadcast table copy (bf16)
        + 8 * r_rows * d                     # weighted / out temporaries (f32)
    )
    nb = max(1, target_bytes // per_row)
    nb = min(nb, 256)
    nb = min(nb, max(1, (n + 7) // 8))       # keep >= 8 grid steps (v7x: 2 TCs x >=4 steps)
    if nb >= 8:
        nb -= nb % 8                          # tidy sublane-friendly block
    return int(max(1, nb))


def srl_fused_forward(pred_all, sent_ids, masks, table, *, row_block=None):
    """pred_all: (N, 3P, T) i32, sent_ids: (N, L) i32, masks: (N, L) f32,
    table: (V, D) bf16/f32 ->
    (mean (N, D) f32, pred/arg0/arg1 (N, P, D) f32)."""
    n, kk, t_len = pred_all.shape
    l_len = sent_ids.shape[-1]
    v_size, d = table.shape
    p = kk // 3
    r_rows = ((1 + kk + 7) // 8) * 8          # pad weight rows to a full sublane tile

    nb = row_block if row_block else _pick_row_block(n, l_len, d, kk, t_len, v_size, r_rows)
    nb = max(1, min(nb, n))
    n_pad = ((n + nb - 1) // nb) * nb
    if n_pad != n:
        # Only tiny id/mask arrays are padded (never a (N, L, D) tensor).
        extra = n_pad - n
        pred_all = jnp.pad(pred_all, ((0, extra), (0, 0), (0, 0)))
        sent_ids = jnp.pad(sent_ids, ((0, extra), (0, 0)))
        masks = jnp.pad(masks, ((0, extra), (0, 0)))

    sent_row = sent_ids.reshape(n_pad, 1, l_len)      # lane layout (matching)
    sent_col = sent_ids.reshape(n_pad, l_len, 1)      # sublane layout (one-hot)
    mask3 = masks.reshape(n_pad, 1, l_len)

    out = pl.pallas_call(
        srl_fused_kernel,
        out_shape=jax.ShapeDtypeStruct((n_pad, r_rows, d), jnp.float32),
        grid=(n_pad // nb,),
        in_specs=[
            pl.BlockSpec((nb, kk, t_len), lambda i: (i, 0, 0)),
            pl.BlockSpec((nb, 1, l_len), lambda i: (i, 0, 0)),
            pl.BlockSpec((nb, l_len, 1), lambda i: (i, 0, 0)),
            pl.BlockSpec((nb, 1, l_len), lambda i: (i, 0, 0)),
            pl.BlockSpec((v_size, d), lambda i: (0, 0)),       # table: constant block
        ],
        out_specs=pl.BlockSpec((nb, r_rows, d), lambda i: (i, 0, 0)),
        scratch_shapes=[pltpu.VMEM((nb, r_rows, l_len), jnp.float32)],
        compiler_params=pltpu.CompilerParams(
            dimension_semantics=("parallel",),        # shards rows over v7x's 2 TCs
            vmem_limit_bytes=32 * 1024 * 1024,        # explicit budget (v5e..v7x safe)
        ),
    )(pred_all, sent_row, sent_col, mask3, table)

    mean = out[:n, 0, :]
    pred_e = out[:n, 1:1 + p, :]
    arg0_e = out[:n, 1 + p:1 + 2 * p, :]
    arg1_e = out[:n, 1 + 2 * p:1 + 3 * p, :]
    return mean, pred_e, arg0_e, arg1_e


# ---------------------------------------------------------------------------
# Module wrapper
# ---------------------------------------------------------------------------
class SRLEmbeddingsPallas:
    def __init__(self, vocab_size=64, embedding_dim=128,
                 key=jax.random.PRNGKey(0), emb_dtype=jnp.bfloat16, row_block=None):
        # Deterministic stand-in "encoder": token embedding table (see TODO above).
        self.embedding_dim = embedding_dim
        self.emb_dtype = emb_dtype
        self.row_block = row_block
        self.table = jax.random.normal(key, (vocab_size, embedding_dim), jnp.float32)
        self.table_q = self.table.astype(emb_dtype)   # bf16 halves VMEM/MXU traffic

    def forward(self, sentence_ids, sentence_attention_masks,
                predicate_ids, predicate_attention_masks,
                arg0_ids, arg0_attention_masks,
                arg1_ids, arg1_attention_masks):
        # predicate/arg attention masks are accepted but unused, exactly like
        # the original module (padding is inferred from token id == 1).
        del predicate_attention_masks, arg0_attention_masks, arg1_attention_masks

        b, s, l_len = sentence_ids.shape
        d = self.embedding_dim
        n = b * s
        _, _, p, t_len = predicate_ids.shape
        assert predicate_ids.shape == arg0_ids.shape == arg1_ids.shape

        ids_flat = sentence_ids.reshape(n, l_len).astype(jnp.int32)
        mask_flat = sentence_attention_masks.reshape(n, l_len).astype(jnp.float32)

        pred_all = jnp.concatenate(
            [predicate_ids.reshape(n, p, t_len),
             arg0_ids.reshape(n, p, t_len),
             arg1_ids.reshape(n, p, t_len)], axis=1).astype(jnp.int32)   # (N, 3P, T)

        mean, pred_e, arg0_e, arg1_e = srl_fused_forward(
            pred_all, ids_flat, mask_flat, self.table_q, row_block=self.row_block)

        return (mean.reshape(b, s, d),
                pred_e.reshape(b, s, p, d),
                arg0_e.reshape(b, s, p, d),
                arg1_e.reshape(b, s, p, d))


# ---------------------------------------------------------------------------
# Pure-JAX reference (correctness check; same bf16-quantized embeddings as the
# kernel, all math in f32 — only exact broadcasts, no matmuls)
# ---------------------------------------------------------------------------
def ref_forward(table, sentence_ids, sentence_masks, pred_ids, arg0_ids, arg1_ids,
                emb_dtype=jnp.bfloat16):
    b, s, l_len = sentence_ids.shape
    n = b * s
    ids_flat = sentence_ids.reshape(n, l_len)
    mask_flat = sentence_masks.reshape(n, l_len).astype(jnp.float32)
    emb = table[ids_flat].astype(emb_dtype).astype(jnp.float32)          # (N, L, D)

    summed = (emb * mask_flat[:, :, None]).sum(axis=1)
    counts = jnp.maximum(mask_flat.sum(-1, keepdims=True), 1.0)
    avg = (summed / counts).reshape(b, s, -1)

    def arg(ids):
        _, _, p, t_len = ids.shape
        q = ids.reshape(n, p, t_len)
        matches = (q[:, :, :, None] == ids_flat[:, None, None, :]) & (q[:, :, :, None] != 1)
        matches = matches & (mask_flat[:, None, None, :] > 0)
        count = matches.sum(axis=2).astype(jnp.float32)                  # (N, P, L)
        weighted = (count[:, :, :, None] * emb[:, None, :, :]).sum(axis=2)
        total = count.sum(-1, keepdims=True)
        out = jnp.where(total > 0, weighted / jnp.maximum(total, 1.0), 0.0)
        return out.reshape(b, s, p, -1)

    return avg, arg(pred_ids), arg(arg0_ids), arg(arg1_ids)


if __name__ == "__main__":
    B, S, L = 2, 8, 16       # batch, num_sentences, max_sentence_length
    P, T = 2, 4              # num_predicates, pred_token_len
    D, V = 128, 64           # embedding dim (stand-in for 768), vocab size

    key = jax.random.PRNGKey(0)
    k_tab, k_ids, k_len, k_pp, k_pm, k_a0p, k_a0m, k_a1p, k_a1m = jax.random.split(key, 9)

    sentence_ids = jax.random.randint(k_ids, (B, S, L), 2, V).astype(jnp.int32)
    lengths = jax.random.randint(k_len, (B, S), 4, L + 1)
    sentence_attention_masks = (jnp.arange(L)[None, None, :] < lengths[..., None]).astype(jnp.int32)

    def make_arg_ids(kp, km):
        pos = jax.random.randint(kp, (B, S, P, T), 0, L)
        b_idx = jnp.arange(B)[:, None, None, None]
        s_idx = jnp.arange(S)[None, :, None, None]
        ids = sentence_ids[b_idx, s_idx, pos]                            # copy real tokens
        pad = jax.random.bernoulli(km, 0.3, (B, S, P, T))
        ids = jnp.where(pad, 1, ids).astype(jnp.int32)                   # 1 == pad token
        masks = (ids != 1).astype(jnp.int32)
        return ids, masks

    predicate_ids, predicate_attention_masks = make_arg_ids(k_pp, k_pm)
    arg0_ids, arg0_attention_masks = make_arg_ids(k_a0p, k_a0m)
    arg1_ids, arg1_attention_masks = make_arg_ids(k_a1p, k_a1m)

    model = SRLEmbeddingsPallas(vocab_size=V, embedding_dim=D, key=k_tab,
                                emb_dtype=jnp.bfloat16)

    outs = model.forward(sentence_ids, sentence_attention_masks,
                         predicate_ids, predicate_attention_masks,
                         arg0_ids, arg0_attention_masks,
                         arg1_ids, arg1_attention_masks)
    outs = jax.block_until_ready(outs)

    refs = ref_forward(model.table, sentence_ids, sentence_attention_masks,
                       predicate_ids, arg0_ids, arg1_ids, emb_dtype=jnp.bfloat16)
    for o, r in zip(outs, refs):
        np.testing.assert_allclose(np.asarray(o), np.asarray(r), rtol=1e-5, atol=1e-5)

    print("KERNEL_OK")
</pallas_src>

<mosaic_0001>
module attributes {stable_mosaic.version = 11 : i64} {
  func.func @srl_fused_kernel(%arg0: i32, %arg1: memref<2x6x4xi32, #tpu.memory_space<vmem>>, %arg2: memref<2x1x16xi32, #tpu.memory_space<vmem>>, %arg3: memref<2x16x1xi32, #tpu.memory_space<vmem>>, %arg4: memref<2x1x16xf32, #tpu.memory_space<vmem>>, %arg5: memref<64x128xbf16, #tpu.memory_space<vmem>>, %arg6: memref<2x8x128xf32, #tpu.memory_space<vmem>>, %arg7: memref<2x8x16xf32, #tpu.memory_space<vmem>>) attributes {dimension_semantics = [#tpu.dimension_semantics<parallel>], iteration_bounds = array<i64: 8>, scalar_prefetch = 0 : i64, scratch_operands = 1 : i64, tpu.core_type = #tpu.core_type<tc>, window_params = [{transform_indices = @transform_0, window_bounds = array<i64: 2, 6, 4>}, {transform_indices = @transform_1, window_bounds = array<i64: 2, 1, 16>}, {transform_indices = @transform_2, window_bounds = array<i64: 2, 16, 1>}, {transform_indices = @transform_3, window_bounds = array<i64: 2, 1, 16>}, {pipeline_mode = #tpu.pipeline_mode<synchronous>, transform_indices = @transform_4, window_bounds = array<i64: 64, 128>}, {transform_indices = @transform_5, window_bounds = array<i64: 2, 8, 128>}]} {
    %c0 = arith.constant 0 : index
    %c0_0 = arith.constant 0 : index
    %c0_1 = arith.constant 0 : index
    %0 = vector.load %arg1[%c0, %c0_0, %c0_1] : memref<2x6x4xi32, #tpu.memory_space<vmem>>, vector<2x6x4xi32>
    %c0_2 = arith.constant 0 : index
    %c0_3 = arith.constant 0 : index
    %c0_4 = arith.constant 0 : index
    %1 = vector.load %arg2[%c0_2, %c0_3, %c0_4] : memref<2x1x16xi32, #tpu.memory_space<vmem>>, vector<2x1x16xi32>
    %c0_5 = arith.constant 0 : index
    %c0_6 = arith.constant 0 : index
    %c0_7 = arith.constant 0 : index
    %2 = vector.load %arg3[%c0_5, %c0_6, %c0_7] : memref<2x16x1xi32, #tpu.memory_space<vmem>>, vector<2x16x1xi32>
    %c0_8 = arith.constant 0 : index
    %c0_9 = arith.constant 0 : index
    %c0_10 = arith.constant 0 : index
    %3 = vector.load %arg4[%c0_8, %c0_9, %c0_10] : memref<2x1x16xf32, #tpu.memory_space<vmem>>, vector<2x1x16xf32>
    %c0_11 = arith.constant 0 : index
    %c0_12 = arith.constant 0 : index
    %4 = vector.load %arg5[%c0_11, %c0_12] : memref<64x128xbf16, #tpu.memory_space<vmem>>, vector<64x128xbf16>
    %cst = arith.constant 0.000000e+00 : f32
    %5 = vector.broadcast %cst : f32 to vector<2x6x16xf32>
    %6 = vector.extract_strided_slice %0 {offsets = [0, 0, 0], sizes = [2, 6, 1], strides = [1, 1, 1]} : vector<2x6x4xi32> to vector<2x6x1xi32>
    %7 = vector.broadcast %6 : vector<2x6x1xi32> to vector<2x6x16xi32>
    %8 = vector.broadcast %1 : vector<2x1x16xi32> to vector<2x6x16xi32>
    %9 = arith.cmpi eq, %7, %8 : vector<2x6x16xi32>
    %c1_i32 = arith.constant 1 : i32
    %10 = vector.broadcast %c1_i32 : i32 to vector<2x6x1xi32>
    %11 = arith.cmpi ne, %6, %10 : vector<2x6x1xi32>
    %12 = vector.broadcast %11 : vector<2x6x1xi1> to vector<2x6x16xi1>
    %13 = arith.andi %9, %12 : vector<2x6x16xi1>
    %14 = arith.extui %13 : vector<2x6x16xi1> to vector<2x6x16xi32>
    %15 = arith.sitofp %14 : vector<2x6x16xi32> to vector<2x6x16xf32>
    %16 = arith.addf %5, %15 : vector<2x6x16xf32>
    %17 = vector.extract_strided_slice %0 {offsets = [0, 0, 1], sizes = [2, 6, 1], strides = [1, 1, 1]} : vector<2x6x4xi32> to vector<2x6x1xi32>
    %18 = vector.broadcast %17 : vector<2x6x1xi32> to vector<2x6x16xi32>
    %19 = vector.broadcast %1 : vector<2x1x16xi32> to vector<2x6x16xi32>
    %20 = arith.cmpi eq, %18, %19 : vector<2x6x16xi32>
    %c1_i32_13 = arith.constant 1 : i32
    %21 = vector.broadcast %c1_i32_13 : i32 to vector<2x6x1xi32>
    %22 = arith.cmpi ne, %17, %21 : vector<2x6x1xi32>
    %23 = vector.broadcast %22 : vector<2x6x1xi1> to vector<2x6x16xi1>
    %24 = arith.andi %20, %23 : vector<2x6x16xi1>
    %25 = arith.extui %24 : vector<2x6x16xi1> to vector<2x6x16xi32>
    %26 = arith.sitofp %25 : vector<2x6x16xi32> to vector<2x6x16xf32>
    %27 = arith.addf %16, %26 : vector<2x6x16xf32>
    %28 = vector.extract_strided_slice %0 {offsets = [0, 0, 2], sizes = [2, 6, 1], strides = [1, 1, 1]} : vector<2x6x4xi32> to vector<2x6x1xi32>
    %29 = vector.broadcast %28 : vector<2x6x1xi32> to vector<2x6x16xi32>
    %30 = vector.broadcast %1 : vector<2x1x16xi32> to vector<2x6x16xi32>
    %31 = arith.cmpi eq, %29, %30 : vector<2x6x16xi32>
    %c1_i32_14 = arith.constant 1 : i32
    %32 = vector.broadcast %c1_i32_14 : i32 to vector<2x6x1xi32>
    %33 = arith.cmpi ne, %28, %32 : vector<2x6x1xi32>
    %34 = vector.broadcast %33 : vector<2x6x1xi1> to vector<2x6x16xi1>
    %35 = arith.andi %31, %34 : vector<2x6x16xi1>
    %36 = arith.extui %35 : vector<2x6x16xi1> to vector<2x6x16xi32>
    %37 = arith.sitofp %36 : vector<2x6x16xi32> to vector<2x6x16xf32>
    %38 = arith.addf %27, %37 : vector<2x6x16xf32>
    %39 = vector.extract_strided_slice %0 {offsets = [0, 0, 3], sizes = [2, 6, 1], strides = [1, 1, 1]} : vector<2x6x4xi32> to vector<2x6x1xi32>
    %40 = vector.broadcast %39 : vector<2x6x1xi32> to vector<2x6x16xi32>
    %41 = vector.broadcast %1 : vector<2x1x16xi32> to vector<2x6x16xi32>
    %42 = arith.cmpi eq, %40, %41 : vector<2x6x16xi32>
    %c1_i32_15 = arith.constant 1 : i32
    %43 = vector.broadcast %c1_i32_15 : i32 to vector<2x6x1xi32>
    %44 = arith.cmpi ne, %39, %43 : vector<2x6x1xi32>
    %45 = vector.broadcast %44 : vector<2x6x1xi1> to vector<2x6x16xi1>
    %46 = arith.andi %42, %45 : vector<2x6x16xi1>
    %47 = arith.extui %46 : vector<2x6x16xi1> to vector<2x6x16xi32>
    %48 = arith.sitofp %47 : vector<2x6x16xi32> to vector<2x6x16xf32>
    %49 = arith.addf %38, %48 : vector<2x6x16xf32>
    %cst_16 = arith.constant 0.000000e+00 : f32
    %50 = vector.broadcast %cst_16 : f32 to vector<2x8x16xf32>
    %c0_17 = arith.constant 0 : index
    %c0_18 = arith.constant 0 : index
    %c0_19 = arith.constant 0 : index
    %51 = vector.load %arg7[%c0_17, %c0_18, %c0_19] : memref<2x8x16xf32, #tpu.memory_space<vmem>>, vector<2x8x16xf32>
    tpu.vector_store %arg7[%c0_17, %c0_18, %c0_19], %50 {strides = array<i32>} : memref<2x8x16xf32, #tpu.memory_space<vmem>>, vector<2x8x16xf32>,
    %c0_20 = arith.constant 0 : index
    %c0_21 = arith.constant 0 : index
    %c0_22 = arith.constant 0 : index
    %52 = vector.load %arg7[%c0_20, %c0_21, %c0_22] : memref<2x8x16xf32, #tpu.memory_space<vmem>>, vector<2x1x16xf32>
    tpu.vector_store %arg7[%c0_20, %c0_21, %c0_22], %3 {strides = array<i32>} : memref<2x8x16xf32, #tpu.memory_space<vmem>>, vector<2x1x16xf32>,
    %53 = vector.broadcast %3 : vector<2x1x16xf32> to vector<2x6x16xf32>
    %54 = arith.mulf %49, %53 : vector<2x6x16xf32>
    %c0_23 = arith.constant 0 : index
    %c1 = arith.constant 1 : index
    %c0_24 = arith.constant 0 : index
    %55 = vector.load %arg7[%c0_23, %c1, %c0_24] : memref<2x8x16xf32, #tpu.memory_space<vmem>>, vector<2x6x16xf32>
    tpu.vector_store %arg7[%c0_23, %c1, %c0_24], %54 {strides = array<i32>} : memref<2x8x16xf32, #tpu.memory_space<vmem>>, vector<2x6x16xf32>,
    %c0_25 = arith.constant 0 : index
    %c0_26 = arith.constant 0 : index
    %c0_27 = arith.constant 0 : index
    %56 = vector.load %arg7[%c0_25, %c0_26, %c0_27] : memref<2x8x16xf32, #tpu.memory_space<vmem>>, vector<2x8x16xf32>
    %57 = tpu.iota {dimensions = array<i32: 2>} : vector<1x1x64xi32>
    %58 = vector.broadcast %2 : vector<2x16x1xi32> to vector<2x16x64xi32>
    %59 = vector.broadcast %57 : vector<1x1x64xi32> to vector<2x16x64xi32>
    %60 = arith.cmpi eq, %58, %59 : vector<2x16x64xi32>
    %61 = arith.extui %60 : vector<2x16x64xi1> to vector<2x16x64xi32>
    %62 = arith.sitofp %61 : vector<2x16x64xi32> to vector<2x16x64xf32>
    %63 = arith.truncf %62 : vector<2x16x64xf32> to vector<2x16x64xbf16>
    %64 = arith.truncf %56 : vector<2x8x16xf32> to vector<2x8x16xbf16>
    "tpu.trace_start"() <{level = 10 : i32, message = "nrl,nlv->nrv"}> : () -> ()
    %cst_28 = arith.constant dense<0.000000e+00> : vector<2x8x64xf32>
    %65 = tpu.matmul %64, %63, %cst_28 {dimension_numbers = #tpu.dot_dimension_numbers<[2], [1], [1], [2], [0, 0, 0, 1, 1, 2], [0], [0]>} : vector<2x8x16xbf16>, vector<2x16x64xbf16>, vector<2x8x64xf32> -> vector<2x8x64xf32>
    "tpu.trace_stop"() : () -> ()
    %66 = vector.shape_cast %4 : vector<64x128xbf16> to vector<1x64x128xbf16>
    %67 = vector.broadcast %66 : vector<1x64x128xbf16> to vector<2x64x128xbf16>
    %68 = arith.truncf %65 : vector<2x8x64xf32> to vector<2x8x64xbf16>
    "tpu.trace_start"() <{level = 10 : i32, message = "nrv,nvd->nrd"}> : () -> ()
    %cst_29 = arith.constant dense<0.000000e+00> : vector<2x8x128xf32>
    %69 = tpu.matmul %68, %67, %cst_29 {dimension_numbers = #tpu.dot_dimension_numbers<[2], [1], [1], [2], [0, 0, 0, 1, 1, 2], [0], [0]>} : vector<2x8x64xbf16>, vector<2x64x128xbf16>, vector<2x8x128xf32> -> vector<2x8x128xf32>
    "tpu.trace_stop"() : () -> ()
    %cst_30 = arith.constant dense<0.000000e+00> : vector<2x8xf32>
    %70 = vector.multi_reduction <add>, %56, %cst_30 [2] : vector<2x8x16xf32> to vector<2x8xf32>
    %71 = vector.shape_cast %70 : vector<2x8xf32> to vector<2x8x1xf32>
    %cst_31 = arith.constant 1.000000e+00 : f32
    %72 = vector.broadcast %cst_31 : f32 to vector<2x8x1xf32>
    %73 = arith.maximumf %71, %72 : vector<2x8x1xf32>
    %74 = tpu.reciprocal %73 : vector<2x8x1xf32> -> vector<2x8x1xf32>
    %cst_32 = arith.constant 0.000000e+00 : f32
    %75 = vector.broadcast %cst_32 : f32 to vector<2x8x1xf32>
    %76 = arith.cmpf ogt, %71, %75 : vector<2x8x1xf32>
    %77 = vector.broadcast %74 : vector<2x8x1xf32> to vector<2x8x128xf32>
    %78 = arith.mulf %69, %77 : vector<2x8x128xf32>
    %cst_33 = arith.constant 0.000000e+00 : f32
    %79 = vector.shape_cast %76 : vector<2x8x1xi1> to vector<2x8x1xi1>
    %80 = vector.broadcast %79 : vector<2x8x1xi1> to vector<2x8x128xi1>
    %81 = vector.broadcast %cst_33 : f32 to vector<2x8x128xf32>
    %82 = arith.select %80, %78, %81 : vector<2x8x128xi1>, vector<2x8x128xf32>
    %c0_34 = arith.constant 0 : index
    %c0_35 = arith.constant 0 : index
    %c0_36 = arith.constant 0 : index
    %83 = vector.load %arg6[%c0_34, %c0_35, %c0_36] : memref<2x8x128xf32, #tpu.memory_space<vmem>>, vector<2x8x128xf32>
    tpu.vector_store %arg6[%c0_34, %c0_35, %c0_36], %82 {strides = array<i32>} : memref<2x8x128xf32, #tpu.memory_space<vmem>>, vector<2x8x128xf32>,
    return
  }
  func.func @transform_0(%arg0: i32) -> (i32, i32, i32) {
    %c0_i32 = arith.constant 0 : i32
    %c0_i32_0 = arith.constant 0 : i32
    %c0_i32_1 = arith.constant 0 : i32
    return %arg0, %c0_i32, %c0_i32_0 : i32, i32, i32
  }
  func.func @transform_1(%arg0: i32) -> (i32, i32, i32) {
    %c0_i32 = arith.constant 0 : i32
    %c0_i32_0 = arith.constant 0 : i32
    %c0_i32_1 = arith.constant 0 : i32
    return %arg0, %c0_i32, %c0_i32_0 : i32, i32, i32
  }
  func.func @transform_2(%arg0: i32) -> (i32, i32, i32) {
    %c0_i32 = arith.constant 0 : i32
    %c0_i32_0 = arith.constant 0 : i32
    %c0_i32_1 = arith.constant 0 : i32
    return %arg0, %c0_i32, %c0_i32_0 : i32, i32, i32
  }
  func.func @transform_3(%arg0: i32) -> (i32, i32, i32) {
    %c0_i32 = arith.constant 0 : i32
    %c0_i32_0 = arith.constant 0 : i32
    %c0_i32_1 = arith.constant 0 : i32
    return %arg0, %c0_i32, %c0_i32_0 : i32, i32, i32
  }
  func.func @transform_4(%arg0: i32) -> (i32, i32) {
    %c0_i32 = arith.constant 0 : i32
    %c0_i32_0 = arith.constant 0 : i32
    %c0_i32_1 = arith.constant 0 : i32
    return %c0_i32, %c0_i32_0 : i32, i32
  }
  func.func @transform_5(%arg0: i32) -> (i32, i32, i32) {
    %c0_i32 = arith.constant 0 : i32
    %c0_i32_0 = arith.constant 0 : i32
    %c0_i32_1 = arith.constant 0 : i32
    return %arg0, %c0_i32, %c0_i32_0 : i32, i32, i32
  }
}

</mosaic_0001>

<llo_original>
// kernel: tpu_custom_call.1
$region0: #{tpu_custom_call.1}
  #allocation0 [shape = 'u32[]', space=smem, size = 0x4, offset = 0x4, fixed_abs, tag = 'smem constant byte address 0x4 - core index']
  #allocation1 [shape = 'u32[144,128]{1,0:T(1,128)}', space=vmem, size = 0x12000, scoped, tag = 'internal scratch']
  #allocation2 [shape = 'f32[2,8,16]{2,1,0:T(8,128)}', space=vmem, size = 0x2000, scoped, tag = 'scratch operand']
  %s0 = inlined_call_operand.vmem [shape: s32[16,6,4], index: 0, kind: input, shape index: {}]
  %s1 = inlined_call_operand.vmem [shape: s32[16,1,16], index: 1, kind: input, shape index: {}]
  %s2 = inlined_call_operand.vmem [shape: s32[16,16,1], index: 2, kind: input, shape index: {}]
  %s3 = inlined_call_operand.vmem [shape: f32[16,1,16], index: 3, kind: input, shape index: {}]
  %s4 = inlined_call_operand.vmem [shape: bf16[64,128], index: 4, kind: input, shape index: {}]
  %s5 = inlined_call_operand.hbm [shape: f32[16,8,128], index: 5, kind: output, shape index: {}]
  %s6 = sld [smem:[#allocation0]]
  $region53: #{tpu_custom_call.1} parent=0
    _
  %s8 = ssub.s32 1, %s6
  %s9 = scalar_select 0, %s8, %s6
  $region1: #{tpu_custom_call.1} parent=0
    #allocation3 [shape = 'u8[16384]{0}', space=vmem, size = 0x4000, scoped, tag = 'output window, operand 0']
    #allocation4 [shape = 's32[2]{0}', space=sflag, size = 0x8, scoped, tag = 'scoped memory for tpu_custom_call.1']
    %10 = vsyncpa [#allocation4], 0
    %s11 = scalar_lea.sflag [#allocation4], 1
    %12 = vsyncpa %s11, 0
    loop: start=0, step=1, limit=10
    $region2: #{tpu_custom_call.1} parent=1 // loop_pre_header
      _
    $region3: #{tpu_custom_call.1} parent=1 // loop_header
      %s14 = sphi 0, %s18
      %p15 = scmp.ge.s32.totalorder %s14, 10
      %s24 = sphi 0, %s26
      %s27 = sphi 0, %s24
      %s28 = sphi 0, %s27
      %s44 = sphi 0, %s28
      %s50 = sphi 0, %s52
      %s53 = sphi 0, %s50
      %s54 = sphi 0, %s53
      %s70 = sphi 0, %s54
      %s76 = sphi 0, %s78
      %s79 = sphi 0, %s76
      %s80 = sphi 0, %s79
      %s96 = sphi 0, %s80
      %s102 = sphi 0, %s104
      %s105 = sphi 0, %s102
      %s106 = sphi 0, %s105
      %s122 = sphi 0, %s106
      %s126 = sphi 0, %s126
      %s128 = sphi 0, %s126
      %s129 = sphi 0, %s128
      %s143 = sphi 0, %s129
      %s149 = sphi 0, %s151
      %s152 = sphi 0, %s149
      %s153 = sphi 0, %s152
      %s169 = sphi 0, %s153
    $region4: #{tpu_custom_call.1} parent=1 // loop_header_branch
      %17 = sbr.rel (%p15) target = $region8
    $region5: #{tpu_custom_call.1} parent=1 // loop_body
      %s19 = ssub.s32 %s14, 1
      %s20 = ssub.s32 %s14, 2
      %s21 = sadd.s32 %s14, 1
      %s22 = ssub.s32 %s14, %s21
      %p23 = scmp.eq.s32.totalorder %s22, 0
      %s25 = sadd.s32 %s24, 1
      %s26 = scalar_select %p23, %s24, %s25
      %p29 = pneg %p23
      %p30 = scmp.eq.s32.totalorder %s14, 7
      %p31 = por %p29, %p30
      %p32 = scmp.ne.s32.totalorder %s24, %s27
      %p33 = scmp.eq.s32.totalorder %s14, 0
      %p34 = por %p32, %p33
      %p35 = scmp.ne.s32.totalorder %s24, %s27
      %p36 = scmp.eq.s32.totalorder %s19, 7
      %p37 = por %p35, %p36
      %p38 = scmp.ne.s32.totalorder %s27, %s28
      %p39 = scmp.eq.s32.totalorder %s19, 0
      %p40 = por %p38, %p39
      %p41 = scmp.ne.s32.totalorder %s27, %s28
      %p42 = scmp.eq.s32.totalorder %s20, 7
      %p43 = por %p41, %p42
      %p45 = scmp.ne.s32.totalorder %s28, %s44
      %p46 = scmp.eq.s32.totalorder %s20, 0
      %p47 = por %p45, %p46
      %s48 = ssub.s32 %s14, %s21
      %p49 = scmp.eq.s32.totalorder %s48, 0
      %s51 = sadd.s32 %s50, 1
      %s52 = scalar_select %p49, %s50, %s51
      %p55 = pneg %p49
      %p56 = scmp.eq.s32.totalorder %s14, 7
      %p57 = por %p55, %p56
      %p58 = scmp.ne.s32.totalorder %s50, %s53
      %p59 = scmp.eq.s32.totalorder %s14, 0
      %p60 = por %p58, %p59
      %p61 = scmp.ne.s32.totalorder %s50, %s53
      %p62 = scmp.eq.s32.totalorder %s19, 7
      %p63 = por %p61, %p62
      %p64 = scmp.ne.s32.totalorder %s53, %s54
      %p65 = scmp.eq.s32.totalorder %s19, 0
      %p66 = por %p64, %p65
      %p67 = scmp.ne.s32.totalorder %s53, %s54
      %p68 = scmp.eq.s32.totalorder %s20, 7
      %p69 = por %p67, %p68
      %p71 = scmp.ne.s32.totalorder %s54, %s70
      %p72 = scmp.eq.s32.totalorder %s20, 0
      %p73 = por %p71, %p72
      %s74 = ssub.s32 %s14, %s21
      %p75 = scmp.eq.s32.totalorder %s74, 0
      %s77 = sadd.s32 %s76, 1
      %s78 = scalar_select %p75, %s76, %s77
      %p81 = pneg %p75
      %p82 = scmp.eq.s32.totalorder %s14, 7
      %p83 = por %p81, %p82
      %p84 = scmp.ne.s32.totalorder %s76, %s79
      %p85 = scmp.eq.s32.totalorder %s14, 0
      %p86 = por %p84, %p85
      %p87 = scmp.ne.s32.totalorder %s76, %s79
      %p88 = scmp.eq.s32.totalorder %s19, 7
      %p89 = por %p87, %p88
      %p90 = scmp.ne.s32.totalorder %s79, %s80
      %p91 = scmp.eq.s32.totalorder %s19, 0
      %p92 = por %p90, %p91
      %p93 = scmp.ne.s32.totalorder %s79, %s80
      %p94 = scmp.eq.s32.totalorder %s20, 7
      %p95 = por %p93, %p94
      %p97 = scmp.ne.s32.totalorder %s80, %s96
      %p98 = scmp.eq.s32.totalorder %s20, 0
      %p99 = por %p97, %p98
      %s100 = ssub.s32 %s14, %s21
      %p101 = scmp.eq.s32.totalorder %s100, 0
      %s103 = sadd.s32 %s102, 1
      %s104 = scalar_select %p101, %s102, %s103
      %p107 = pneg %p101
      %p108 = scmp.eq.s32.totalorder %s14, 7
      %p109 = por %p107, %p108
      %p110 = scmp.ne.s32.totalorder %s102, %s105
      %p111 = scmp.eq.s32.totalorder %s14, 0
      %p112 = por %p110, %p111
      %p113 = scmp.ne.s32.totalorder %s102, %s105
      %p114 = scmp.eq.s32.totalorder %s19, 7
      %p115 = por %p113, %p114
      %p116 = scmp.ne.s32.totalorder %s105, %s106
      %p117 = scmp.eq.s32.totalorder %s19, 0
      %p118 = por %p116, %p117
      %p119 = scmp.ne.s32.totalorder %s105, %s106
      %p120 = scmp.eq.s32.totalorder %s20, 7
      %p121 = por %p119, %p120
      %p123 = scmp.ne.s32.totalorder %s106, %s122
      %p124 = scmp.eq.s32.totalorder %s20, 0
      %p125 = por %p123, %p124
      %s127 = sadd.s32 %s126, 1
      %p130 = scmp.eq.s32.totalorder %s14, 7
      %p131 = scmp.ne.s32.totalorder %s126, %s128
      %p132 = scmp.eq.s32.totalorder %s14, 0
      %p133 = por %p131, %p132
      %p134 = scmp.ne.s32.totalorder %s126, %s128
      %p135 = scmp.eq.s32.totalorder %s19, 7
      %p136 = por %p134, %p135
      %p137 = scmp.ne.s32.totalorder %s128, %s129
      %p138 = scmp.eq.s32.totalorder %s19, 0
      %p139 = por %p137, %p138
      %p140 = scmp.ne.s32.totalorder %s128, %s129
      %p141 = scmp.eq.s32.totalorder %s20, 7
      %p142 = por %p140, %p141
      %p144 = scmp.ne.s32.totalorder %s129, %s143
      %p145 = scmp.eq.s32.totalorder %s20, 0
      %p146 = por %p144, %p145
      %s147 = ssub.s32 %s14, %s21
      %p148 = scmp.eq.s32.totalorder %s147, 0
      %s150 = sadd.s32 %s149, 1
      %s151 = scalar_select %p148, %s149, %s150
      %p154 = pneg %p148
      %p155 = scmp.eq.s32.totalorder %s14, 7
      %p156 = por %p154, %p155
      %p157 = scmp.ne.s32.totalorder %s149, %s152
      %p158 = scmp.eq.s32.totalorder %s14, 0
      %p159 = por %p157, %p158
      %p160 = scmp.ne.s32.totalorder %s149, %s152
      %p161 = scmp.eq.s32.totalorder %s19, 7
      %p162 = por %p160, %p161
      %p163 = scmp.ne.s32.totalorder %s152, %s153
      %p164 = scmp.eq.s32.totalorder %s19, 0
      %p165 = por %p163, %p164
      %p166 = scmp.ne.s32.totalorder %s152, %s153
      %p167 = scmp.eq.s32.totalorder %s20, 7
      %p168 = por %p166, %p167
      %p170 = scmp.ne.s32.totalorder %s153, %s169
      %p171 = scmp.eq.s32.totalorder %s20, 0
      %p172 = por %p170, %p171
      %p173 = scmp.le.s32.totalorder 1, %s14
      %p174 = scmp.lt.s32.totalorder %s14, 9
      %p175 = pnand %p173, %p174
      %p176 = pneg %p175
      // Predicated region
      $region9: #{tpu_custom_call.1} parent=5 // pred_check
        _
      $region10: #{tpu_custom_call.1} parent=5 // pred_check_branch
        %178 = sbr.rel (%p175) target = $region12
      $region11: #{tpu_custom_call.1} parent=5 // pred_region
        %s179 = ssub.s32 %s14, 1
        // Predicated region
        $region13: #{tpu_custom_call.1} parent=11 // pred_check
          %p180 = pneg %p139
        $region14: #{tpu_custom_call.1} parent=11 // pred_check_branch
          %182 = sbr.rel (%p180) target = $region16
        $region15: #{tpu_custom_call.1} parent=11 // pred_region
          _
        $region16: #{tpu_custom_call.1} parent=11 // pred_fallthru
          _
      $region12: #{tpu_custom_call.1} parent=5 // pred_fallthru
        _
      %p183 = scmp.lt.s32.totalorder %s14, 8
      // Predicated region
      $region17: #{tpu_custom_call.1} parent=5 // pred_check
        %p184 = pneg %p183
      $region18: #{tpu_custom_call.1} parent=5 // pred_check_branch
        %186 = sbr.rel (%p184) target = $region20
      $region19: #{tpu_custom_call.1} parent=5 // pred_region
        // Predicated region
        $region21: #{tpu_custom_call.1} parent=19 // pred_check
          %p187 = pneg %p34
        $region22: #{tpu_custom_call.1} parent=19 // pred_check_branch
          %189 = sbr.rel (%p187) target = $region24
        $region23: #{tpu_custom_call.1} parent=19 // pred_region
          %s190 = smul.u32 2, %s14
          %p191 = scmp.lt.s32.totalorder %s190, 15
          %s192 = scalar_select %p191, %s190, 15
          %s193 = smul.addr %s192, 8
          %s194 = scalar_lea.vmem %s0, %s193
          %s195 = smul.u32 2, %s14
        $region24: #{tpu_custom_call.1} parent=19 // pred_fallthru
          _
        // Predicated region
        $region25: #{tpu_custom_call.1} parent=19 // pred_check
          %p196 = pneg %p60
        $region26: #{tpu_custom_call.1} parent=19 // pred_check_branch
          %198 = sbr.rel (%p196) target = $region28
        $region27: #{tpu_custom_call.1} parent=19 // pred_region
          %s199 = smul.u32 2, %s14
          %p200 = scmp.lt.s32.totalorder %s199, 15
          %s201 = scalar_select %p200, %s199, 15
          %s202 = scalar_lea.vmem %s1, %s201
          %s203 = smul.u32 2, %s14
        $region28: #{tpu_custom_call.1} parent=19 // pred_fallthru
          _
        // Predicated region
        $region29: #{tpu_custom_call.1} parent=19 // pred_check
          %p204 = pneg %p86
        $region30: #{tpu_custom_call.1} parent=19 // pred_check_branch
          %206 = sbr.rel (%p204) target = $region32
        $region31: #{tpu_custom_call.1} parent=19 // pred_region
          %s207 = smul.u32 2, %s14
          %p208 = scmp.lt.s32.totalorder %s207, 15
          %s209 = scalar_select %p208, %s207, 15
          %s210 = smul.addr %s209, 2
          %s211 = smul.addr %s210, 8
          %s212 = scalar_lea.vmem %s2, %s211
          %s213 = smul.u32 2, %s14
        $region32: #{tpu_custom_call.1} parent=19 // pred_fallthru
          _
        // Predicated region
        $region33: #{tpu_custom_call.1} parent=19 // pred_check
          %p214 = pneg %p112
        $region34: #{tpu_custom_call.1} parent=19 // pred_check_branch
          %216 = sbr.rel (%p214) target = $region36
        $region35: #{tpu_custom_call.1} parent=19 // pred_region
          %s217 = smul.u32 2, %s14
          %p218 = scmp.lt.s32.totalorder %s217, 15
          %s219 = scalar_select %p218, %s217, 15
          %s220 = scalar_lea.vmem %s3, %s219
          %s221 = smul.u32 2, %s14
        $region36: #{tpu_custom_call.1} parent=19 // pred_fallthru
          _
      $region20: #{tpu_custom_call.1} parent=5 // pred_fallthru
        _
      %p222 = scmp.le.s32.totalorder 1, %s14
      %p223 = scmp.lt.s32.totalorder %s14, 9
      %p224 = pnand %p222, %p223
      %p225 = pneg %p224
      // Predicated region
      $region37: #{tpu_custom_call.1} parent=5 // pred_check
        _
      $region38: #{tpu_custom_call.1} parent=5 // pred_check_branch
        %227 = sbr.rel (%p224) target = $region40
      $region39: #{tpu_custom_call.1} parent=5 // pred_region
        %s228 = ssub.s32 %s14, 1
        %s229 = smul.u32 2, %s19
        %p230 = scmp.lt.s32.totalorder %s229, 15
        %s231 = scalar_select %p230, %s229, 15
        %s232 = smul.addr %s231, 8
        %s233 = scalar_lea.vmem %s0, %s232
        %p234 = pneg %p40
        %p235 = pneg %p37
        %s236 = smul.u32 2, %s19
        %p237 = scmp.lt.s32.totalorder %s236, 15
        %s238 = scalar_select %p237, %s236, 15
        %s239 = scalar_lea.vmem %s1, %s238
        %p240 = pneg %p66
        %p241 = pneg %p63
        %s242 = smul.u32 2, %s19
        %p243 = scmp.lt.s32.totalorder %s242, 15
        %s244 = scalar_select %p243, %s242, 15
        %s245 = smul.addr %s244, 2
        %s246 = smul.addr %s245, 8
        %s247 = scalar_lea.vmem %s2, %s246
        %p248 = pneg %p92
        %p249 = pneg %p89
        %s250 = smul.u32 2, %s19
        %p251 = scmp.lt.s32.totalorder %s250, 15
        %s252 = scalar_select %p251, %s250, 15
        %s253 = scalar_lea.vmem %s3, %s252
        %p254 = pneg %p118
        %p255 = pneg %p115
        %p256 = pneg %p139
        %p257 = pneg %p136
        %p258 = pneg %p165
        %p259 = pneg %p162
        %s260 = sand.u32 %s152, 1
        %s261 = scalar_lea.sflag [#allocation4], %s260
        %s262 = sand.u32 %s152, 1
        %s263 = smul.addr %s262, 16
        %s264 = scalar_lea.vmem [#allocation3], %s263
        %s265 = smul.u32 2, %s19
        %p266 = scmp.lt.s32.totalorder %s265, 15
        %s267 = scalar_select %p266, %s265, 15
        %s268 = smul.addr %s267, 8
        %s269 = scalar_lea.vmem %s0, %s268
        %s270 = smul.u32 2, %s19
        %s271 = smul.u32 2, %s19
        %p272 = scmp.lt.s32.totalorder %s271, 15
        %s273 = scalar_select %p272, %s271, 15
        %s274 = scalar_lea.vmem %s1, %s273
        %s275 = smul.u32 2, %s19
        %s276 = smul.u32 2, %s19
        %p277 = scmp.lt.s32.totalorder %s276, 15
        %s278 = scalar_select %p277, %s276, 15
        %s279 = smul.addr %s278, 2
        %s280 = smul.addr %s279, 8
        %s281 = scalar_lea.vmem %s2, %s280
        %s282 = smul.u32 2, %s19
        %s283 = smul.u32 2, %s19
        %p284 = scmp.lt.s32.totalorder %s283, 15
        %s285 = scalar_select %p284, %s283, 15
        %s286 = scalar_lea.vmem %s3, %s285
        %s287 = smul.u32 2, %s19
        %s288 = smul.u32 2, %s19
        %v290 = vld [vmem:[%s269] sm:$0x3f]
        %v291 = vld [vmem:[%s269 + $0x8] sm:$0x3f]
        %v292 = vld [vmem:[%s274] sm:$0x1]
        %v293 = vld [vmem:[%s274 + $0x1] sm:$0x1]
        %v294 = vld [vmem:[%s281] sm:$0xff]
        %v295 = vld [vmem:[%s281 + $0x8] sm:$0xff]
        %v296 = vld [vmem:[%s281 + $0x10] sm:$0xff]
        %v297 = vld [vmem:[%s281 + $0x18] sm:$0xff]
        %v298 = vld [vmem:[%s286] sm:$0x1]
        %v299 = vld [vmem:[%s286 + $0x1] sm:$0x1]
        %v300 = vld [vmem:[%s4] sm:$0xf]
        %v301 = vld [vmem:[%s4 + $0x4] sm:$0xf]
        %v302 = vld [vmem:[%s4 + $0x8] sm:$0xf]
        %v303 = vld [vmem:[%s4 + $0xc] sm:$0xf]
        %v304 = vld [vmem:[%s4 + $0x10] sm:$0xf]
        %v305 = vld [vmem:[%s4 + $0x14] sm:$0xf]
        %v306 = vld [vmem:[%s4 + $0x18] sm:$0xf]
        %v307 = vld [vmem:[%s4 + $0x1c] sm:$0xf]
        %308 = vset.pattern.permute.xlu0 0
        %309 = vperm.xlu0 %308, %v290
        %v310 = vpop.permute.xlu0 %309
        %311 = vset.pattern.permute.xlu0 0
        %312 = vperm.xlu0 %311, %v291
        %v313 = vpop.permute.xlu0 %312
        %v314 = vlaneseq
        %v315 = vshrl.u32 %v314, 7
        %v316 = vsub.s32 0, %v315
        %v317 = vrot.slane %v292, %v316
        %v318 = vlaneseq
        %v319 = vshrl.u32 %v318, 7
        %v320 = vsub.s32 0, %v319
        %v321 = vrot.slane %v293, %v320
        %vm322 = vcmp.eq.s32.totalorder %v310, %v317
        %vm323 = vcmp.eq.s32.totalorder %v313, %v321
        %vm324 = vcmp.ne.s32.totalorder %v290, 1
        %vm325 = vcmp.ne.s32.totalorder %v291, 1
        %v326 = vsel %vm324, 1, 0
        %v327 = vsel %vm325, 1, 0
        %328 = vset.pattern.permute.xlu0 0
        %329 = vperm.xlu0 %328, %v326
        %v330 = vpop.permute.xlu0 %329
        %331 = vset.pattern.permute.xlu0 0
        %332 = vperm.xlu0 %331, %v327
        %v333 = vpop.permute.xlu0 %332
        %vm334 = vcmp.eq.s32.totalorder %v330, 1
        %vm335 = vcmp.eq.s32.totalorder %v333, 1
        %vm336 = vmand %vm322, %vm334
        %vm337 = vmand %vm323, %vm335
        %v338 = vsel %vm336, 1, 0
        %v339 = vsel %vm337, 1, 0
        %v340 = vcvt.s32.f32 %v338
        %v341 = vcvt.s32.f32 %v339
        %v342 = vadd.f32 %v340, 0.0
        %v343 = vadd.f32 %v341, 0.0
        %344 = vset.pattern.permute.xlu0 1
        %345 = vperm.xlu0 %344, %v290
        %v346 = vpop.permute.xlu0 %345
        %347 = vset.pattern.permute.xlu0 1
        %348 = vperm.xlu0 %347, %v291
        %v349 = vpop.permute.xlu0 %348
        %vm350 = vcmp.eq.s32.totalorder %v346, %v317
        %vm351 = vcmp.eq.s32.totalorder %v349, %v321
        %352 = vset.pattern.permute.xlu0 1
        %353 = vperm.xlu0 %352, %v326
        %v354 = vpop.permute.xlu0 %353
        %355 = vset.pattern.permute.xlu0 1
        %356 = vperm.xlu0 %355, %v327
        %v357 = vpop.permute.xlu0 %356
        %vm358 = vcmp.eq.s32.totalorder %v354, 1
        %vm359 = vcmp.eq.s32.totalorder %v357, 1
        %vm360 = vmand %vm350, %vm358
        %vm361 = vmand %vm351, %vm359
        %v362 = vsel %vm360, 1, 0
        %v363 = vsel %vm361, 1, 0
        %v364 = vcvt.s32.f32 %v362
        %v365 = vcvt.s32.f32 %v363
        %v366 = vadd.f32 %v342, %v364
        %v367 = vadd.f32 %v343, %v365
        %368 = vset.pattern.permute.xlu0 2
        %369 = vperm.xlu0 %368, %v290
        %v370 = vpop.permute.xlu0 %369
        %371 = vset.pattern.permute.xlu0 2
        %372 = vperm.xlu0 %371, %v291
        %v373 = vpop.permute.xlu0 %372
        %vm374 = vcmp.eq.s32.totalorder %v370, %v317
        %vm375 = vcmp.eq.s32.totalorder %v373, %v321
        %376 = vset.pattern.permute.xlu0 2
        %377 = vperm.xlu0 %376, %v326
        %v378 = vpop.permute.xlu0 %377
        %379 = vset.pattern.permute.xlu0 2
        %380 = vperm.xlu0 %379, %v327
        %v381 = vpop.permute.xlu0 %380
        %vm382 = vcmp.eq.s32.totalorder %v378, 1
        %vm383 = vcmp.eq.s32.totalorder %v381, 1
        %vm384 = vmand %vm374, %vm382
        %vm385 = vmand %vm375, %vm383
        %v386 = vsel %vm384, 1, 0
        %v387 = vsel %vm385, 1, 0
        %v388 = vcvt.s32.f32 %v386
        %v389 = vcvt.s32.f32 %v387
        %v390 = vadd.f32 %v366, %v388
        %v391 = vadd.f32 %v367, %v389
        %392 = vset.pattern.permute.xlu0 3
        %393 = vperm.xlu0 %392, %v290
        %v394 = vpop.permute.xlu0 %393
        %395 = vset.pattern.permute.xlu0 3
        %396 = vperm.xlu0 %395, %v291
        %v397 = vpop.permute.xlu0 %396
        %vm398 = vcmp.eq.s32.totalorder %v394, %v317
        %vm399 = vcmp.eq.s32.totalorder %v397, %v321
        %400 = vset.pattern.permute.xlu0 3
        %401 = vperm.xlu0 %400, %v326
        %v402 = vpop.permute.xlu0 %401
        %403 = vset.pattern.permute.xlu0 3
        %404 = vperm.xlu0 %403, %v327
        %v405 = vpop.permute.xlu0 %404
        %vm406 = vcmp.eq.s32.totalorder %v402, 1
        %vm407 = vcmp.eq.s32.totalorder %v405, 1
        %vm408 = vmand %vm398, %vm406
        %vm409 = vmand %vm399, %vm407
        %v410 = vsel %vm408, 1, 0
        %v411 = vsel %vm409, 1, 0
        %v412 = vcvt.s32.f32 %v410
        %v413 = vcvt.s32.f32 %v411
        %v414 = vadd.f32 %v390, %v412
        %v415 = vadd.f32 %v391, %v413
        %vm416 = vcmask 130048
        %417 = vst.msk [vmem:[#allocation2] sm:$0xff] %vm416, 0.0
        %418 = vst.msk [vmem:[#allocation2 + $0x8] sm:$0xff] %vm416, 0.0
        %vm419 = vcmask 122880
        %420 = vst.msk [vmem:[#allocation2] sm:$0x1] %vm419, %v298
        %421 = vst.msk [vmem:[#allocation2 + $0x8] sm:$0x1] %vm419, %v299
        %v424 = vlaneseq
        %v425 = vshrl.u32 %v424, 7
        %v426 = vsub.s32 0, %v425
        %v427 = vrot.slane %v298, %v426
        %v428 = vlaneseq
        %v429 = vshrl.u32 %v428, 7
        %v430 = vsub.s32 0, %v429
        %v431 = vrot.slane %v299, %v430
        %v434 = vmul.f32 %v414, %v427
        %v435 = vmul.f32 %v415, %v431
        %vm436 = vcmask 128000
        %437 = vst.msk [vmem:[#allocation2 + $0x1] sm:$0x3f] %vm436, %v434
        %438 = vst.msk [vmem:[#allocation2 + $0x9] sm:$0x3f] %vm436, %v435
        %v439 = vld [vmem:[#allocation2] sm:$0xff]
        %v440 = vld [vmem:[#allocation2 + $0x8] sm:$0xff]
        %v441 = vlaneseq
        %v442 = vand.u32 %v441, 127
        %443 = vset.pattern.permute.xlu0 0
        %444 = vperm.xlu0 %443, %v294
        %v445 = vpop.permute.xlu0 %444
        %446 = vset.pattern.permute.xlu0 0
        %447 = vperm.xlu0 %446, %v295
        %v448 = vpop.permute.xlu0 %447
        %449 = vset.pattern.permute.xlu0 0
        %450 = vperm.xlu0 %449, %v296
        %v451 = vpop.permute.xlu0 %450
        %452 = vset.pattern.permute.xlu0 0
        %453 = vperm.xlu0 %452, %v297
        %v454 = vpop.permute.xlu0 %453
        %vm455 = vcmp.eq.s32.totalorder %v445, %v442
        %vm456 = vcmp.eq.s32.totalorder %v448, %v442
        %vm457 = vcmp.eq.s32.totalorder %v451, %v442
        %vm458 = vcmp.eq.s32.totalorder %v454, %v442
        %v459 = vsel %vm455, 1, 0
        %v460 = vsel %vm456, 1, 0
        %v461 = vsel %vm457, 1, 0
        %v462 = vsel %vm458, 1, 0
        %v463 = vcvt.s32.f32 %v459
        %v464 = vcvt.s32.f32 %v460
        %v465 = vcvt.s32.f32 %v461
        %v466 = vcvt.s32.f32 %v462
        %v467 = vpack.c.bf16 %v464, %v463
        %v468 = vpack.c.bf16 %v466, %v465
        %v469 = vpack.c.bf16 %v439, %v439
        %v470 = vpack.c.bf16 %v440, %v440
        %v472 = vsel %vm416, %v469, 0
        %474 = vmatprep.subr.bf16.mxu0 0
        %475 = vmatpush1.bf16.msra.mxu0 %v467
        %476 = vmatprep.subr.bf16.mxu0 0
        %477 = vmatpush1.bf16.msra.mxu0 0
        %478 = vmatprep.subr.bf16.mxu0 0
        %479 = vmatpush1.bf16.msra.mxu0 0
        %480 = vmatprep.subr.bf16.mxu0 0
        %481 = vmatpush1.bf16.msra.mxu0 0
        %482 = vmatprep.subr.bf16.mxu0 0
        %483 = vmatpush1.bf16.msra.mxu0 0
        %484 = vmatprep.subr.bf16.mxu0 0
        %485 = vmatpush1.bf16.msra.mxu0 0
        %486 = vmatprep.subr.bf16.mxu0 0
        %487 = vmatpush1.bf16.msra.mxu0 0
        %488 = vmatprep.subr.bf16.mxu0 0
        %489 = vmatpush1.bf16.msra.mxu0 0
        %490 = vmatprep.subr.bf16.mxu0 0
        %491 = vmatpush1.bf16.msra.mxu0 0
        %492 = vmatprep.subr.bf16.mxu0 0
        %493 = vmatpush1.bf16.msra.mxu0 0
        %494 = vmatprep.subr.bf16.mxu0 0
        %495 = vmatpush1.bf16.msra.mxu0 0
        %496 = vmatprep.subr.bf16.mxu0 0
        %497 = vmatpush1.bf16.msra.mxu0 0
        %498 = vmatprep.subr.bf16.mxu0 0
        %499 = vmatpush1.bf16.msra.mxu0 0
        %500 = vmatprep.subr.bf16.mxu0 0
        %501 = vmatpush1.bf16.msra.mxu0 0
        %502 = vmatprep.subr.bf16.mxu0 0
        %503 = vmatpush1.bf16.msra.mxu0 0
        %504 = vmatprep.subr.bf16.mxu0 0
        %505 = vmatpush1.bf16.msra.mxu0 0
        %506 = vmatprep.mubr.bf16.mxu0 0
        %507 = vmatmul.mubr.bf16.gmra.mrb[0].mxu0 %v472
        %v508 = vpop.f32.mrb[0].mxu0
        %v509 = vadd.f32 0.0, %v508
        %v510 = vpop.f32.mrb[0].mxu0
        %v511 = vpop.f32.mrb[0].mxu0
        %v512 = vpop.f32.mrb[0].mxu0
        %513 = vdwg.mxu0
        %v515 = vsel %vm416, %v470, 0
        %517 = vmatprep.subr.bf16.mxu0 0
        %518 = vmatpush1.bf16.msra.mxu0 %v468
        %519 = vmatprep.subr.bf16.mxu0 0
        %520 = vmatpush1.bf16.msra.mxu0 0
        %521 = vmatprep.subr.bf16.mxu0 0
        %522 = vmatpush1.bf16.msra.mxu0 0
        %523 = vmatprep.subr.bf16.mxu0 0
        %524 = vmatpush1.bf16.msra.mxu0 0
        %525 = vmatprep.subr.bf16.mxu0 0
        %526 = vmatpush1.bf16.msra.mxu0 0
        %527 = vmatprep.subr.bf16.mxu0 0
        %528 = vmatpush1.bf16.msra.mxu0 0
        %529 = vmatprep.subr.bf16.mxu0 0
        %530 = vmatpush1.bf16.msra.mxu0 0
        %531 = vmatprep.subr.bf16.mxu0 0
        %532 = vmatpush1.bf16.msra.mxu0 0
        %533 = vmatprep.subr.bf16.mxu0 0
        %534 = vmatpush1.bf16.msra.mxu0 0
        %535 = vmatprep.subr.bf16.mxu0 0
        %536 = vmatpush1.bf16.msra.mxu0 0
        %537 = vmatprep.subr.bf16.mxu0 0
        %538 = vmatpush1.bf16.msra.mxu0 0
        %539 = vmatprep.subr.bf16.mxu0 0
        %540 = vmatpush1.bf16.msra.mxu0 0
        %541 = vmatprep.subr.bf16.mxu0 0
        %542 = vmatpush1.bf16.msra.mxu0 0
        %543 = vmatprep.subr.bf16.mxu0 0
        %544 = vmatpush1.bf16.msra.mxu0 0
        %545 = vmatprep.subr.bf16.mxu0 0
        %546 = vmatpush1.bf16.msra.mxu0 0
        %547 = vmatprep.subr.bf16.mxu0 0
        %548 = vmatpush1.bf16.msra.mxu0 0
        %549 = vmatprep.mubr.bf16.mxu0 0
        %550 = vmatmul.mubr.bf16.gmra.mrb[0].mxu0 %v515
        %v551 = vpop.f32.mrb[0].mxu0
        %v552 = vadd.f32 0.0, %v551
        %v553 = vpop.f32.mrb[0].mxu0
        %v554 = vpop.f32.mrb[0].mxu0
        %v555 = vpop.f32.mrb[0].mxu0
        %556 = vdwg.mxu0
        %v557 = vpack.c.bf16 %v509, %v509
        %v558 = vpack.c.bf16 %v552, %v552
        %v567 = vunpack.c.l.b16 %v300
        %v568 = vunpack.c.l.b16 %v301
        %v569 = vunpack.c.l.b16 %v302
        %v570 = vunpack.c.l.b16 %v303
        %v571 = vunpack.c.l.b16 %v304
        %v572 = vunpack.c.l.b16 %v305
        %v573 = vunpack.c.l.b16 %v306
        %v574 = vunpack.c.l.b16 %v307
        %v575 = vpack.c.b16 %v568, %v567
        %v576 = vpack.c.b16 %v570, %v569
        %v577 = vpack.c.b16 %v572, %v571
        %v578 = vpack.c.b16 %v574, %v573
        %vm583 = vcmask 523264
        %v585 = vsel %vm583, %v557, 0
        %587 = vmatprep.subr.bf16.mxu0 0
        %588 = vmatpush1.bf16.msra.mxu0 %v575
        %589 = vmatprep.subr.bf16.mxu0 0
        %590 = vmatpush1.bf16.msra.mxu0 %v576
        %591 = vmatprep.subr.bf16.mxu0 0
        %592 = vmatpush1.bf16.msra.mxu0 %v577
        %593 = vmatprep.subr.bf16.mxu0 0
        %594 = vmatpush1.bf16.msra.mxu0 %v578
        %595 = vmatprep.subr.bf16.mxu0 0
        %596 = vmatpush1.bf16.msra.mxu0 0
        %597 = vmatprep.subr.bf16.mxu0 0
        %598 = vmatpush1.bf16.msra.mxu0 0
        %599 = vmatprep.subr.bf16.mxu0 0
        %600 = vmatpush1.bf16.msra.mxu0 0
        %601 = vmatprep.subr.bf16.mxu0 0
        %602 = vmatpush1.bf16.msra.mxu0 0
        %603 = vmatprep.subr.bf16.mxu0 0
        %604 = vmatpush1.bf16.msra.mxu0 0
        %605 = vmatprep.subr.bf16.mxu0 0
        %606 = vmatpush1.bf16.msra.mxu0 0
        %607 = vmatprep.subr.bf16.mxu0 0
        %608 = vmatpush1.bf16.msra.mxu0 0
        %609 = vmatprep.subr.bf16.mxu0 0
        %610 = vmatpush1.bf16.msra.mxu0 0
        %611 = vmatprep.subr.bf16.mxu0 0
        %612 = vmatpush1.bf16.msra.mxu0 0
        %613 = vmatprep.subr.bf16.mxu0 0
        %614 = vmatpush1.bf16.msra.mxu0 0
        %615 = vmatprep.subr.bf16.mxu0 0
        %616 = vmatpush1.bf16.msra.mxu0 0
        %617 = vmatprep.subr.bf16.mxu0 0
        %618 = vmatpush1.bf16.msra.mxu0 0
        %619 = vmatprep.mubr.bf16.mxu0 0
        %620 = vmatmul.mubr.bf16.gmra.mrb[0].mxu0 %v585
        %v621 = vpop.f32.mrb[0].mxu0
        %v622 = vadd.f32 0.0, %v621
        %v623 = vpop.f32.mrb[0].mxu0
        %v624 = vpop.f32.mrb[0].mxu0
        %v625 = vpop.f32.mrb[0].mxu0
        %626 = vdwg.mxu0
        %v628 = vsel %vm583, %v558, 0
        %630 = vmatprep.subr.bf16.mxu0 0
        %631 = vmatpush1.bf16.msra.mxu0 %v575
        %632 = vmatprep.subr.bf16.mxu0 0
        %633 = vmatpush1.bf16.msra.mxu0 %v576
        %634 = vmatprep.subr.bf16.mxu0 0
        %635 = vmatpush1.bf16.msra.mxu0 %v577
        %636 = vmatprep.subr.bf16.mxu0 0
        %637 = vmatpush1.bf16.msra.mxu0 %v578
        %638 = vmatprep.subr.bf16.mxu0 0
        %639 = vmatpush1.bf16.msra.mxu0 0
        %640 = vmatprep.subr.bf16.mxu0 0
        %641 = vmatpush1.bf16.msra.mxu0 0
        %642 = vmatprep.subr.bf16.mxu0 0
        %643 = vmatpush1.bf16.msra.mxu0 0
        %644 = vmatprep.subr.bf16.mxu0 0
        %645 = vmatpush1.bf16.msra.mxu0 0
        %646 = vmatprep.subr.bf16.mxu0 0
        %647 = vmatpush1.bf16.msra.mxu0 0
        %648 = vmatprep.subr.bf16.mxu0 0
        %649 = vmatpush1.bf16.msra.mxu0 0
        %650 = vmatprep.subr.bf16.mxu0 0
        %651 = vmatpush1.bf16.msra.mxu0 0
        %652 = vmatprep.subr.bf16.mxu0 0
        %653 = vmatpush1.bf16.msra.mxu0 0
        %654 = vmatprep.subr.bf16.mxu0 0
        %655 = vmatpush1.bf16.msra.mxu0 0
        %656 = vmatprep.subr.bf16.mxu0 0
        %657 = vmatpush1.bf16.msra.mxu0 0
        %658 = vmatprep.subr.bf16.mxu0 0
        %659 = vmatpush1.bf16.msra.mxu0 0
        %660 = vmatprep.subr.bf16.mxu0 0
        %661 = vmatpush1.bf16.msra.mxu0 0
        %662 = vmatprep.mubr.bf16.mxu0 0
        %663 = vmatmul.mubr.bf16.gmra.mrb[0].mxu0 %v628
        %v664 = vpop.f32.mrb[0].mxu0
        %v665 = vadd.f32 0.0, %v664
        %v666 = vpop.f32.mrb[0].mxu0
        %v667 = vpop.f32.mrb[0].mxu0
        %v668 = vpop.f32.mrb[0].mxu0
        %669 = vdwg.mxu0
        %v670 = vsel %vm416, %v439, 0.0
        %671 = vadd.xlane.f32.xlu0 %v670
        %v672 = vpop.xlane.xlu0 %671
        %v673 = vsel %vm416, %v440, 0.0
        %674 = vadd.xlane.f32.xlu0 %v673
        %v675 = vpop.xlane.xlu0 %674
        %v676 = vmax.f32 %v672, 1.0
        %v677 = vmax.f32 %v675, 1.0
        %v678 = vrcp.pop %v676
        %v679 = vrcp.pop %v677
        %vm680 = vcmp.gt.f32.partialorder %v672, 0.0
        %vm681 = vcmp.gt.f32.partialorder %v675, 0.0
        %v682 = vmul.f32 %v622, %v678
        %v683 = vmul.f32 %v665, %v679
        %v684 = vsel %vm680, 1, 0
        %v685 = vsel %vm681, 1, 0
        %vm686 = vcmp.eq.s32.totalorder %v684, 1
        %vm687 = vcmp.eq.s32.totalorder %v685, 1
        %v688 = vsel %vm686, %v682, 0.0
        %v689 = vsel %vm687, %v683, 0.0
        %690 = vst [vmem:[%s264] sm:$0xff] %v688
        %691 = vst [vmem:[%s264 + $0x8] sm:$0xff] %v689
        %s692 = sand.u32 %s152, 1
        %s693 = scalar_lea.sflag [#allocation4], %s692
        %s694 = sand.u32 %s152, 1
        %s695 = smul.addr %s694, 16
        %s696 = scalar_lea.vmem [#allocation3], %s695
        // Predicated region
        $region41: #{tpu_custom_call.1} parent=39 // pred_check
          %p697 = pneg %p162
        $region42: #{tpu_custom_call.1} parent=39 // pred_check_branch
          %699 = sbr.rel (%p697) target = $region44
        $region43: #{tpu_custom_call.1} parent=39 // pred_region
          %s700 = smul.u32 2, %s19
          %s702 = ssub.s32 256, 256
          %703 = vsyncadd %s693, %s702
          %s704 = smul.addr %s700, 128
          %s705 = scalar_lea.hbm %s5, %s704
          %s706 = sshll.u32 %s696, 4
          %s707 = int_to_ptr.vmem [resolvable:$true] %s706
          %712 = dma.vmem_to_hbm [thread:$0]  %s707, 256, %s705, %s693, 128, 128, 8
        $region44: #{tpu_custom_call.1} parent=39 // pred_fallthru
          _
      $region40: #{tpu_custom_call.1} parent=5 // pred_fallthru
        _
      %p713 = scmp.le.s32.totalorder 2, %s14
      // Predicated region
      $region45: #{tpu_custom_call.1} parent=5 // pred_check
        %p714 = pneg %p713
      $region46: #{tpu_custom_call.1} parent=5 // pred_check_branch
        %716 = sbr.rel (%p714) target = $region48
      $region47: #{tpu_custom_call.1} parent=5 // pred_region
        %s717 = ssub.s32 %s14, 2
        // Predicated region
        $region49: #{tpu_custom_call.1} parent=47 // pred_check
          %p718 = pneg %p168
        $region50: #{tpu_custom_call.1} parent=47 // pred_check_branch
          %720 = sbr.rel (%p718) target = $region52
        $region51: #{tpu_custom_call.1} parent=47 // pred_region
          %s721 = sand.u32 %s153, 1
          %s722 = scalar_lea.sflag [#allocation4], %s721
          %s723 = sand.u32 %s153, 1
          %s724 = smul.addr %s723, 16
          %s725 = scalar_lea.vmem [#allocation3], %s724
          %726 = dma.done %s722, 256
        $region52: #{tpu_custom_call.1} parent=47 // pred_fallthru
          _
      $region48: #{tpu_custom_call.1} parent=5 // pred_fallthru
        _
    $region6: #{tpu_custom_call.1} parent=1 // loop_footer
      %s18 = sadd.s32 1, %s14
    $region7: #{tpu_custom_call.1} parent=1 // loop_footer_branch
      %13 = sbr.rel target = $region3
    $region8: #{tpu_custom_call.1} parent=1 // loop_exit
      _
    %727 = vsyncpa [#allocation4], 1
    %s728 = scalar_lea.sflag [#allocation4], 1
    %729 = vsyncpa %s728, 1

</llo_original>
